<compile_context>
chip_gen: v7x
topology: tpu7x:2x2x1
jax: 0.10.0
libtpu: 0.0.40
codegen_flags: <defaults>
</compile_context>

<pallas_src>
import numpy as np
import jax
import jax.numpy as jnp
from jax.experimental import pallas as pl
from jax.experimental.pallas import tpu as pltpu


def build_pe(d_model: int, max_len: int = 5000, dtype=jnp.float32) -> jnp.ndarray:
    """Deterministic buffer construction, mirroring PositionalEncoding.__init__."""
    position = np.arange(0, max_len, dtype=np.float32)[:, None]          # [max_len, 1]
    div_term = np.exp(np.arange(0, d_model // 2, dtype=np.float32)
                      * -(np.log(10000.0) / d_model))                    # [d_model//2]
    if d_model % 2 == 1:
        div_term = np.concatenate([div_term, div_term[-1:]])
    pe = np.zeros((max_len, d_model), dtype=np.float32)
    pe[:, 0::2] = np.sin(position * div_term)
    pe[:, 1::2] = np.cos(
        position * div_term[: len(div_term) - (0 if d_model % 2 == 0 else 1)]
    )
    return jnp.asarray(pe, dtype=dtype)


def _pe_add_kernel(x_ref, pe_ref, o_ref):
    # x_ref/o_ref: (B, TS, L); pe_ref: (1, TS, L) or (TS, L) -> broadcast over batch.
    # Add in the promoted (output) dtype to match PyTorch type promotion.
    o_ref[...] = x_ref[...].astype(o_ref.dtype) + pe_ref[...].astype(o_ref.dtype)


def _round_up(v: int, m: int) -> int:
    return -(-v // m) * m


def _round_down(v: int, m: int) -> int:
    return (v // m) * m


def _sublanes(dtype) -> int:
    # f32 -> 8 sublanes per vreg tile, bf16 -> 16, int8/fp8 -> 32.
    return max(8, 32 // jnp.dtype(dtype).itemsize)


def _chip_profile():
    """Per-chip (budget, target-x-block) in bytes; conservative defaults otherwise."""
    kind = ""
    try:
        kind = jax.devices()[0].device_kind.lower()
    except Exception:
        pass
    if "v7" in kind or "7x" in kind:
        # 32 MiB default scoped VMEM, 3.2 TB/s HBM: bigger blocks + even grid split.
        return {"budget": 28 << 20, "target": 6 << 20, "prefer_even": True}
    if "v6" in kind:
        # 32 MiB default scoped VMEM: use most of it.
        return {"budget": 26 << 20, "target": 4 << 20, "prefer_even": False}
    # v5e / unknown: tightest default scoped VMEM (16 MiB).
    return {"budget": 13 << 20, "target": 2 << 20, "prefer_even": False}


def _pick_tile_rows(rows, lane, B, sub, x_item, pe_item, out_item,
                    budget, target, prefer_even):
    """Pick TS along the second-to-last axis (rows total, `lane` in the last axis).

    Accounts for the full double-buffered working set 2*(x + out + pe) with the
    dense 3-D layout (no sublane padding: TS is a multiple of `sub`)."""
    if rows <= sub:
        return rows                                   # full-extent block: always legal
    per_row = lane * (2 * B * (x_item + out_item) + 2 * pe_item)
    ts = min(max(1, budget // per_row),
             max(sub, target // max(1, B * lane * x_item)))
    ts = max(sub, _round_down(ts, sub))
    ts = min(ts, _round_up(rows, sub))
    nsteps = -(-rows // ts)
    if prefer_even:
        # v7x: make sure both TensorCores get work (>=2 steps, even count).
        if nsteps == 1:
            ts = min(ts, _round_up(-(-rows // 2), sub))
            nsteps = -(-rows // ts)
        if nsteps > 1 and nsteps % 2 == 1:
            ts2 = _round_up(-(-rows // (nsteps + 1)), sub)
            if ts2 >= sub and (-(-rows // ts2)) % 2 == 0:
                ts = ts2
                nsteps = -(-rows // ts)
    # Shrink the ragged last block / over-fetch when it costs no extra steps.
    ts_snap = _round_up(-(-rows // nsteps), sub)
    if sub <= ts_snap <= ts:
        ts = ts_snap
    return ts


def positional_encoding_forward(x: jnp.ndarray, pe: jnp.ndarray) -> jnp.ndarray:
    """x: [B, S, D].  Returns x + pe[:S, :] broadcast over batch (promoted dtype)."""
    B, S, D = x.shape
    max_len, d_model = pe.shape
    assert d_model == D and S <= max_len

    out_dtype = jnp.result_type(x.dtype, pe.dtype)    # PyTorch-style promotion
    x_item = jnp.dtype(x.dtype).itemsize
    pe_item = jnp.dtype(pe.dtype).itemsize
    out_item = jnp.dtype(out_dtype).itemsize
    sub = max(_sublanes(x.dtype), _sublanes(pe.dtype), _sublanes(out_dtype))

    prof = _chip_profile()
    n = S * D
    cost = pl.CostEstimate(flops=B * n, transcendentals=0,
                           bytes_accessed=B * n * x_item + n * pe_item + B * n * out_item)
    cparams = pltpu.CompilerParams(dimension_semantics=("parallel",))

    if n % 128 == 0:
        # Lane-dense 3-D tiled path: fully dense vregs/VMEM regardless of batch.
        rows = n // 128
        ts = _pick_tile_rows(rows, 128, B, sub, x_item, pe_item, out_item,
                             prof["budget"], prof["target"], prof["prefer_even"])
        x3 = x.reshape(B, rows, 128)                  # free row-major metadata reshape
        if ts % sub == 0 and (max_len * D) % 128 == 0:
            pe3 = pe.reshape(1, (max_len * D) // 128, 128)   # window the full buffer
        else:
            # ts == rows < sub (or max_len*D not lane-divisible): tiny slice copy so
            # the (rows, 128) block matches the full array extent (layout-legal).
            pe3 = pe[:S].reshape(1, rows, 128)
        out3 = pl.pallas_call(
            _pe_add_kernel,
            out_shape=jax.ShapeDtypeStruct((B, rows, 128), out_dtype),
            grid=(pl.cdiv(rows, ts),),
            in_specs=[
                pl.BlockSpec((B, ts, 128), lambda i: (0, i, 0)),   # x tile (dense)
                pl.BlockSpec((1, ts, 128), lambda i: (0, i, 0)),   # pe tile (read once)
            ],
            out_specs=pl.BlockSpec((B, ts, 128), lambda i: (0, i, 0)),
            compiler_params=cparams,
            cost_estimate=cost,
        )(x3, pe3)
        return out3.reshape(B, S, D)

    # Fallback: S*D not a multiple of 128 -> tile along S; D stays the full
    # (layout-legal) last dim; pe windowed from the full buffer when possible.
    ts = _pick_tile_rows(S, D, B, sub, x_item, pe_item, out_item,
                         prof["budget"], prof["target"], prof["prefer_even"])
    if ts % sub == 0:
        pe_in = pe                                     # full buffer, rows line up
    else:
        pe_in = pe[:S]                                 # ts == S < sub: full-extent block
    out = pl.pallas_call(
        _pe_add_kernel,
        out_shape=jax.ShapeDtypeStruct((B, S, D), out_dtype),
        grid=(pl.cdiv(S, ts),),
        in_specs=[
            pl.BlockSpec((B, ts, D), lambda i: (0, i, 0)),
            pl.BlockSpec((ts, D), lambda i: (i, 0)),
        ],
        out_specs=pl.BlockSpec((B, ts, D), lambda i: (0, i, 0)),
        compiler_params=cparams,
        cost_estimate=cost,
    )(x, pe_in)
    return out


def _check(x, pe):
    out = jax.block_until_ready(positional_encoding_forward(x, pe))
    S = x.shape[1]
    ref = x.astype(out.dtype) + pe[:S, :].astype(out.dtype)[None, :, :]
    np.testing.assert_allclose(np.asarray(out), np.asarray(ref), rtol=1e-6, atol=1e-6)


if __name__ == "__main__":
    key = jax.random.PRNGKey(0)

    # 1) Small main-path case (rows < sublanes): B=2, S=8, D=32.
    k1, k2, k3, k4 = jax.random.split(key, 4)
    x1 = jax.random.normal(k1, (2, 8, 32), dtype=jnp.float32)
    _check(x1, build_pe(32, max_len=64))

    # 2) Tiled main-path case (rows >= sublanes, full-pe windowing).
    x2 = jax.random.normal(k2, (2, 64, 128), dtype=jnp.float32)
    _check(x2, build_pe(128, max_len=128))

    # 3) Fallback path (S*D not a multiple of 128), S a multiple of 8.
    x3 = jax.random.normal(k3, (2, 8, 24), dtype=jnp.float32)
    _check(x3, build_pe(24, max_len=32))

    # 4) Fallback path with S < 8 (full-extent blocks + sliced pe).
    x4 = jax.random.normal(k4, (2, 5, 24), dtype=jnp.float32)
    _check(x4, build_pe(24, max_len=32))

    print("KERNEL_OK")
</pallas_src>

<mosaic_0001>
module attributes {stable_mosaic.version = 11 : i64} {
  func.func @_pe_add_kernel(%arg0: i32, %arg1: memref<2x2x128xf32, #tpu.memory_space<vmem>>, %arg2: memref<1x2x128xf32, #tpu.memory_space<vmem>>, %arg3: memref<2x2x128xf32, #tpu.memory_space<vmem>>) attributes {dimension_semantics = [#tpu.dimension_semantics<parallel>], iteration_bounds = array<i64: 1>, scalar_prefetch = 0 : i64, scratch_operands = 0 : i64, tpu.core_type = #tpu.core_type<tc>, window_params = [{transform_indices = @transform_0, window_bounds = array<i64: 2, 2, 128>}, {transform_indices = @transform_1, window_bounds = array<i64: 1, 2, 128>}, {transform_indices = @transform_2, window_bounds = array<i64: 2, 2, 128>}]} {
    %c0 = arith.constant 0 : index
    %c0_0 = arith.constant 0 : index
    %c0_1 = arith.constant 0 : index
    %0 = vector.load %arg1[%c0, %c0_0, %c0_1] : memref<2x2x128xf32, #tpu.memory_space<vmem>>, vector<2x2x128xf32>
    %c0_2 = arith.constant 0 : index
    %c0_3 = arith.constant 0 : index
    %c0_4 = arith.constant 0 : index
    %1 = vector.load %arg2[%c0_2, %c0_3, %c0_4] : memref<1x2x128xf32, #tpu.memory_space<vmem>>, vector<1x2x128xf32>
    %2 = vector.broadcast %1 : vector<1x2x128xf32> to vector<2x2x128xf32>
    %3 = arith.addf %0, %2 : vector<2x2x128xf32>
    %c0_5 = arith.constant 0 : index
    %c0_6 = arith.constant 0 : index
    %c0_7 = arith.constant 0 : index
    %4 = vector.load %arg3[%c0_5, %c0_6, %c0_7] : memref<2x2x128xf32, #tpu.memory_space<vmem>>, vector<2x2x128xf32>
    tpu.vector_store %arg3[%c0_5, %c0_6, %c0_7], %3 {strides = array<i32>} : memref<2x2x128xf32, #tpu.memory_space<vmem>>, vector<2x2x128xf32>,
    return
  }
  func.func @transform_0(%arg0: i32) -> (i32, i32, i32) {
    %c0_i32 = arith.constant 0 : i32
    %c0_i32_0 = arith.constant 0 : i32
    %c0_i32_1 = arith.constant 0 : i32
    return %c0_i32, %arg0, %c0_i32_0 : i32, i32, i32
  }
  func.func @transform_1(%arg0: i32) -> (i32, i32, i32) {
    %c0_i32 = arith.constant 0 : i32
    %c0_i32_0 = arith.constant 0 : i32
    %c0_i32_1 = arith.constant 0 : i32
    return %c0_i32, %arg0, %c0_i32_0 : i32, i32, i32
  }
  func.func @transform_2(%arg0: i32) -> (i32, i32, i32) {
    %c0_i32 = arith.constant 0 : i32
    %c0_i32_0 = arith.constant 0 : i32
    %c0_i32_1 = arith.constant 0 : i32
    return %c0_i32, %arg0, %c0_i32_0 : i32, i32, i32
  }
}

</mosaic_0001>

<llo_original>
// kernel: tpu_custom_call.1
$region0: #{tpu_custom_call.1}
  #allocation0 [shape = 'u32[]', space=smem, size = 0x4, offset = 0x4, fixed_abs, tag = 'smem constant byte address 0x4 - core index']
  #allocation1 [shape = 'u32[144,128]{1,0:T(1,128)}', space=vmem, size = 0x12000, scoped, tag = 'internal scratch']
  %s0 = inlined_call_operand.hbm [shape: f32[2,2,128], index: 0, kind: input, shape index: {}]
  %s1 = inlined_call_operand.vmem [shape: f32[1,2,128], index: 1, kind: input, shape index: {}]
  %s2 = inlined_call_operand.hbm [shape: f32[2,2,128], index: 2, kind: output, shape index: {}]
  %s3 = sld [smem:[#allocation0]]
  $region22: #{tpu_custom_call.1} parent=0
    _
  %s5 = ssub.s32 1, %s3
  %s6 = scalar_select 0, %s5, %s3
  $region1: #{tpu_custom_call.1} parent=0
    #allocation2 [shape = 'u8[2048]{0}', space=vmem, size = 0x800, scoped, tag = 'input window, operand 0, single buffered']
    #allocation3 [shape = 's32[1]{0}', space=sflag, size = 0x4, scoped, tag = 'scoped memory for tpu_custom_call.1']
    #allocation4 [shape = 's32[1]{0}', space=sflag, size = 0x4, scoped, tag = 'scoped memory for tpu_custom_call.1']
    #allocation5 [shape = 'u8[2048]{0}', space=vmem, size = 0x800, scoped, tag = 'output window, operand 0, single buffered']
    %7 = vsyncpa [#allocation3], 0
    %8 = vsyncpa [#allocation4], 0
    // Predicated region
    $region2: #{tpu_custom_call.1} parent=1 // pred_check
      _
    $region3: #{tpu_custom_call.1} parent=1 // pred_check_branch
      %10 = sbr.rel (0) target = $region5
    $region4: #{tpu_custom_call.1} parent=1 // pred_region
      %s12 = ssub.s32 64, 64
      %13 = vsyncadd [#allocation3], %s12
      %s14 = sshll.u32 [#allocation2], 4
      %s15 = int_to_ptr.vmem [resolvable:$true] %s14
      %20 = dma.hbm_to_vmem [thread:$0]  %s0, 64, %s15, [#allocation3], 32, 32, 2
    $region5: #{tpu_custom_call.1} parent=1 // pred_fallthru
      _
    // Predicated region
    $region6: #{tpu_custom_call.1} parent=1 // pred_check
      _
    $region7: #{tpu_custom_call.1} parent=1 // pred_check_branch
      %22 = sbr.rel (0) target = $region9
    $region8: #{tpu_custom_call.1} parent=1 // pred_region
      _
    $region9: #{tpu_custom_call.1} parent=1 // pred_fallthru
      _
    // Predicated region
    $region10: #{tpu_custom_call.1} parent=1 // pred_check
      _
    $region11: #{tpu_custom_call.1} parent=1 // pred_check_branch
      %24 = sbr.rel (0) target = $region13
    $region12: #{tpu_custom_call.1} parent=1 // pred_region
      %25 = dma.done [#allocation3], 64
    $region13: #{tpu_custom_call.1} parent=1 // pred_fallthru
      _
    %v26 = vld [vmem:[#allocation2] sm:$0x3]
    %v27 = vld [vmem:[#allocation2 + $0x2] sm:$0x3]
    %v28 = vld [vmem:[%s1] sm:$0x3]
    %v29 = vadd.f32 %v26, %v28
    %v30 = vadd.f32 %v27, %v28
    %31 = vst [vmem:[#allocation5] sm:$0x3] %v29
    %32 = vst [vmem:[#allocation5 + $0x2] sm:$0x3] %v30
    // Predicated region
    $region14: #{tpu_custom_call.1} parent=1 // pred_check
      _
    $region15: #{tpu_custom_call.1} parent=1 // pred_check_branch
      %34 = sbr.rel (0) target = $region17
    $region16: #{tpu_custom_call.1} parent=1 // pred_region
      %s36 = ssub.s32 64, 64
      %37 = vsyncadd [#allocation4], %s36
      %s38 = sshll.u32 [#allocation5], 4
      %s39 = int_to_ptr.vmem [resolvable:$true] %s38
      %44 = dma.vmem_to_hbm [thread:$0]  %s39, 64, %s2, [#allocation4], 32, 32, 2
    $region17: #{tpu_custom_call.1} parent=1 // pred_fallthru
      _
    // Predicated region
    $region18: #{tpu_custom_call.1} parent=1 // pred_check
      _
    $region19: #{tpu_custom_call.1} parent=1 // pred_check_branch
      %46 = sbr.rel (0) target = $region21
    $region20: #{tpu_custom_call.1} parent=1 // pred_region
      %47 = dma.done [#allocation4], 64
    $region21: #{tpu_custom_call.1} parent=1 // pred_fallthru
      _
    %48 = vsyncpa [#allocation3], 1
    %49 = vsyncpa [#allocation4], 1

</llo_original>
